<compile_context>
chip_gen: v7x
topology: tpu7x:2x2x1
jax: 0.10.0
libtpu: 0.0.40
codegen_flags: <defaults>
</compile_context>

<pallas_src>
import jax
import jax.numpy as jnp
from jax import lax
from jax.experimental import pallas as pl
from jax.experimental.pallas import tpu as pltpu

BN_EPS = 1e-5
_LANE = 128


def _round_up(n, m):
    return ((n + m - 1) // m) * m


def _gain_forward_kernel(data_ref, mask_ref, w1_ref, w2_ref, w3_ref, pvec_ref,
                         out_ref):
    # Static (lane-padded) feature widths, read off the weight ref shapes.
    h1p = w1_ref.shape[1]
    h2p = w2_ref.shape[1]
    dop = w3_ref.shape[1]

    # One DMA for all seven tiny per-feature vectors; static row views.
    p = pvec_ref[...]                                   # [8, pw] f32
    b1, g1, be1 = p[0:1, :h1p], p[1:2, :h1p], p[2:3, :h1p]
    b2, g2, be2 = p[3:4, :h2p], p[4:5, :h2p], p[5:6, :h2p]
    b3 = p[6:7, :dop]

    inv_b = 1.0 / data_ref.shape[0]                     # static

    # ---- layer 1: in-kernel 128-aligned lane concat -> single matmul -------
    x = jnp.concatenate([data_ref[...], mask_ref[...]], axis=1)   # [B, 2*dp]
    h1 = jnp.dot(x, w1_ref[...], preferred_element_type=jnp.float32)
    h1 = jnp.maximum(h1 + b1, 0.0)                                # [B, h1p]

    # ---- BatchNorm1d (training stats): one fused reduction over [h | h*h] --
    st = jnp.sum(jnp.concatenate([h1, h1 * h1], axis=1),
                 axis=0, keepdims=True)                           # [1, 2*h1p]
    mean1 = st[:, :h1p] * inv_b
    var1 = jnp.maximum(st[:, h1p:] * inv_b - mean1 * mean1, 0.0)  # clamp >= 0
    scale1 = g1 * lax.rsqrt(var1 + BN_EPS)                        # pad lanes: g=0
    shift1 = be1 - mean1 * scale1
    h1 = h1 * scale1 + shift1

    # ---- layer 2 ------------------------------------------------------------
    h2 = jnp.dot(h1, w2_ref[...], preferred_element_type=jnp.float32)
    h2 = jnp.maximum(h2 + b2, 0.0)                                # [B, h2p]

    st = jnp.sum(jnp.concatenate([h2, h2 * h2], axis=1),
                 axis=0, keepdims=True)                           # [1, 2*h2p]
    mean2 = st[:, :h2p] * inv_b
    var2 = jnp.maximum(st[:, h2p:] * inv_b - mean2 * mean2, 0.0)
    scale2 = g2 * lax.rsqrt(var2 + BN_EPS)
    shift2 = be2 - mean2 * scale2
    h2 = h2 * scale2 + shift2

    # ---- layer 3: matmul + bias + exact sigmoid (EUP exp, exact divide) ----
    logits = jnp.dot(h2, w3_ref[...], preferred_element_type=jnp.float32) + b3
    out_ref[...] = 1.0 / (1.0 + jnp.exp(-logits))                 # [B, dop]


@jax.jit
def gain_forward(data, mask, params):
    """Single fused pallas_call; feature axes lane-padded to 128."""
    data = data.astype(jnp.float32)
    mask = mask.astype(jnp.float32)
    B, dim = data.shape
    h1d = params["G_W1"].shape[1]
    h2d = params["G_W2"].shape[1]

    dp = _round_up(dim, _LANE)
    h1p = _round_up(h1d, _LANE)
    h2p = _round_up(h2d, _LANE)
    pw = max(dp, h1p, h2p)

    # Lane-pad the per-call inputs (tiny XLA pads).
    data_p = jnp.pad(data, ((0, 0), (0, dp - dim)))
    mask_p = jnp.pad(mask, ((0, 0), (0, dp - dim)))

    # Zero-pad weights to lane-dense tiles; padded BN lanes see gamma=0 so
    # they stay exactly zero through every layer (no NaN, no contamination).
    w1 = params["G_W1"].astype(jnp.float32)
    w1a = jnp.pad(w1[:dim], ((0, dp - dim), (0, h1p - h1d)))
    w1b = jnp.pad(w1[dim:], ((0, dp - dim), (0, h1p - h1d)))
    w1_packed = jnp.concatenate([w1a, w1b], axis=0)               # [2*dp, h1p]
    w2_p = jnp.pad(params["G_W2"].astype(jnp.float32),
                   ((0, h1p - h1d), (0, h2p - h2d)))
    w3_p = jnp.pad(params["G_W3"].astype(jnp.float32),
                   ((0, h2p - h2d), (0, dp - dim)))

    # Pack the 7 per-feature vectors into one [8, pw] array -> one input DMA.
    pvec = jnp.zeros((8, pw), jnp.float32)
    pvec = pvec.at[0, :h1d].set(params["G_b1"].reshape(-1))
    pvec = pvec.at[1, :h1d].set(params["bn1_gamma"].reshape(-1))
    pvec = pvec.at[2, :h1d].set(params["bn1_beta"].reshape(-1))
    pvec = pvec.at[3, :h2d].set(params["G_b2"].reshape(-1))
    pvec = pvec.at[4, :h2d].set(params["bn2_gamma"].reshape(-1))
    pvec = pvec.at[5, :h2d].set(params["bn2_beta"].reshape(-1))
    pvec = pvec.at[6, :dim].set(params["G_b3"].reshape(-1))

    vmem = pl.BlockSpec(memory_space=pltpu.MemorySpace.VMEM)
    out_p = pl.pallas_call(
        _gain_forward_kernel,
        out_shape=jax.ShapeDtypeStruct((B, dp), jnp.float32),
        in_specs=[vmem] * 6,
        out_specs=vmem,
    )(data_p, mask_p, w1_packed, w2_p, w3_p, pvec)
    return out_p[:, :dim]


def xavier_init(key, size):
    # matches GAIN's xavier_init: normal with stddev = 1/sqrt(fan_in/2)
    stddev = 1.0 / jnp.sqrt(size[0] / 2.0)
    return jax.random.normal(key, size, dtype=jnp.float32) * stddev


def init_params(key, dim, hidden_dim1, hidden_dim2):
    ks = jax.random.split(key, 10)
    # Non-trivial biases / BN affine params so the packed-vector path is
    # actually exercised by the correctness check.
    return {
        "G_W1": xavier_init(ks[0], (dim * 2, hidden_dim1)),
        "G_b1": 0.1 * jax.random.normal(ks[1], (hidden_dim1,), jnp.float32),
        "bn1_gamma": 1.0 + 0.1 * jax.random.normal(ks[2], (hidden_dim1,), jnp.float32),
        "bn1_beta": 0.1 * jax.random.normal(ks[3], (hidden_dim1,), jnp.float32),
        "G_W2": xavier_init(ks[4], (hidden_dim1, hidden_dim2)),
        "G_b2": 0.1 * jax.random.normal(ks[5], (hidden_dim2,), jnp.float32),
        "bn2_gamma": 1.0 + 0.1 * jax.random.normal(ks[6], (hidden_dim2,), jnp.float32),
        "bn2_beta": 0.1 * jax.random.normal(ks[7], (hidden_dim2,), jnp.float32),
        "G_W3": xavier_init(ks[8], (hidden_dim2, dim)),
        "G_b3": 0.1 * jax.random.normal(ks[9], (dim,), jnp.float32),
    }


def reference_forward(data, mask, params):
    """Pure-JAX reference of the PyTorch forward (training-mode BN)."""
    x = jnp.concatenate([data, mask], axis=1).astype(jnp.float32)
    h1 = jnp.maximum(x @ params["G_W1"] + params["G_b1"], 0.0)
    m1 = h1.mean(0, keepdims=True)
    v1 = ((h1 - m1) ** 2).mean(0, keepdims=True)
    h1 = (h1 - m1) / jnp.sqrt(v1 + BN_EPS) * params["bn1_gamma"] + params["bn1_beta"]
    h2 = jnp.maximum(h1 @ params["G_W2"] + params["G_b2"], 0.0)
    m2 = h2.mean(0, keepdims=True)
    v2 = ((h2 - m2) ** 2).mean(0, keepdims=True)
    h2 = (h2 - m2) / jnp.sqrt(v2 + BN_EPS) * params["bn2_gamma"] + params["bn2_beta"]
    return jax.nn.sigmoid(h2 @ params["G_W3"] + params["G_b3"])


if __name__ == "__main__":
    B, DIM, H1, H2 = 8, 16, 32, 32

    key = jax.random.PRNGKey(0)
    k_data, k_mask, k_param = jax.random.split(key, 3)

    data = jax.random.uniform(k_data, (B, DIM), dtype=jnp.float32)
    mask = (jax.random.uniform(k_mask, (B, DIM)) > 0.2).astype(jnp.float32)
    data = data * mask  # missing entries zeroed, as in GAIN preprocessing

    params = init_params(k_param, DIM, H1, H2)

    out = jax.block_until_ready(gain_forward(data, mask, params))
    ref = reference_forward(data, mask, params)

    assert out.shape == (B, DIM)
    assert bool(jnp.all(jnp.isfinite(out)))
    assert jnp.allclose(out, ref, atol=1e-3, rtol=1e-3), "mismatch vs reference"

    # TODO(synk): BatchNorm1d running_mean/running_var momentum updates are
    # training-state bookkeeping (module buffers), not part of the returned
    # tensor; intentionally omitted.

    print("KERNEL_OK")
</pallas_src>

<mosaic_0001>
module attributes {stable_mosaic.version = 11 : i64} {
  func.func @_gain_forward_kernel(%arg0: memref<8x128xf32, #tpu.memory_space<vmem>>, %arg1: memref<8x128xf32, #tpu.memory_space<vmem>>, %arg2: memref<256x128xf32, #tpu.memory_space<vmem>>, %arg3: memref<128x128xf32, #tpu.memory_space<vmem>>, %arg4: memref<128x128xf32, #tpu.memory_space<vmem>>, %arg5: memref<8x128xf32, #tpu.memory_space<vmem>>, %arg6: memref<8x128xf32, #tpu.memory_space<vmem>>) attributes {dimension_semantics = [], scalar_prefetch = 0 : i64, scratch_operands = 0 : i64, tpu.core_type = #tpu.core_type<tc>} {
    %c0 = arith.constant 0 : index
    %c0_0 = arith.constant 0 : index
    %0 = vector.load %arg5[%c0, %c0_0] : memref<8x128xf32, #tpu.memory_space<vmem>>, vector<8x128xf32>
    %1 = vector.extract_strided_slice %0 {offsets = [0, 0], sizes = [1, 128], strides = [1, 1]} : vector<8x128xf32> to vector<1x128xf32>
    %2 = vector.extract_strided_slice %0 {offsets = [1, 0], sizes = [1, 128], strides = [1, 1]} : vector<8x128xf32> to vector<1x128xf32>
    %3 = vector.extract_strided_slice %0 {offsets = [2, 0], sizes = [1, 128], strides = [1, 1]} : vector<8x128xf32> to vector<1x128xf32>
    %4 = vector.extract_strided_slice %0 {offsets = [3, 0], sizes = [1, 128], strides = [1, 1]} : vector<8x128xf32> to vector<1x128xf32>
    %5 = vector.extract_strided_slice %0 {offsets = [4, 0], sizes = [1, 128], strides = [1, 1]} : vector<8x128xf32> to vector<1x128xf32>
    %6 = vector.extract_strided_slice %0 {offsets = [5, 0], sizes = [1, 128], strides = [1, 1]} : vector<8x128xf32> to vector<1x128xf32>
    %7 = vector.extract_strided_slice %0 {offsets = [6, 0], sizes = [1, 128], strides = [1, 1]} : vector<8x128xf32> to vector<1x128xf32>
    %c0_1 = arith.constant 0 : index
    %c0_2 = arith.constant 0 : index
    %8 = vector.load %arg0[%c0_1, %c0_2] : memref<8x128xf32, #tpu.memory_space<vmem>>, vector<8x128xf32>
    %c0_3 = arith.constant 0 : index
    %c0_4 = arith.constant 0 : index
    %9 = vector.load %arg1[%c0_3, %c0_4] : memref<8x128xf32, #tpu.memory_space<vmem>>, vector<8x128xf32>
    %10 = tpu.concatenate %8, %9 in 1 : vector<8x128xf32>, vector<8x128xf32> -> vector<8x256xf32>
    %c0_5 = arith.constant 0 : index
    %c0_6 = arith.constant 0 : index
    %11 = vector.load %arg2[%c0_5, %c0_6] : memref<256x128xf32, #tpu.memory_space<vmem>>, vector<256x128xf32>
    %cst = arith.constant dense<0.000000e+00> : vector<8x128xf32>
    %12 = tpu.matmul %10, %11, %cst {dimension_numbers = #tpu.dot_dimension_numbers<[1], [0], [0], [1], [0, 0, 1, 1], [], []>} : vector<8x256xf32>, vector<256x128xf32>, vector<8x128xf32> -> vector<8x128xf32>
    %13 = vector.broadcast %1 : vector<1x128xf32> to vector<8x128xf32>
    %14 = arith.addf %12, %13 : vector<8x128xf32>
    %cst_7 = arith.constant 0.000000e+00 : f32
    %15 = vector.broadcast %cst_7 : f32 to vector<8x128xf32>
    %16 = arith.maximumf %14, %15 : vector<8x128xf32>
    %17 = arith.mulf %16, %16 : vector<8x128xf32>
    %18 = tpu.concatenate %16, %17 in 1 : vector<8x128xf32>, vector<8x128xf32> -> vector<8x256xf32>
    %cst_8 = arith.constant dense<0.000000e+00> : vector<256xf32>
    %19 = vector.multi_reduction <add>, %18, %cst_8 [0] : vector<8x256xf32> to vector<256xf32>
    %20 = vector.shape_cast %19 : vector<256xf32> to vector<1x256xf32>
    %21 = vector.extract_strided_slice %20 {offsets = [0, 0], sizes = [1, 128], strides = [1, 1]} : vector<1x256xf32> to vector<1x128xf32>
    %cst_9 = arith.constant 1.250000e-01 : f32
    %22 = vector.broadcast %cst_9 : f32 to vector<1x128xf32>
    %23 = arith.mulf %21, %22 : vector<1x128xf32>
    %24 = vector.extract_strided_slice %20 {offsets = [0, 128], sizes = [1, 128], strides = [1, 1]} : vector<1x256xf32> to vector<1x128xf32>
    %cst_10 = arith.constant 1.250000e-01 : f32
    %25 = vector.broadcast %cst_10 : f32 to vector<1x128xf32>
    %26 = arith.mulf %24, %25 : vector<1x128xf32>
    %27 = arith.mulf %23, %23 : vector<1x128xf32>
    %28 = arith.subf %26, %27 : vector<1x128xf32>
    %cst_11 = arith.constant 0.000000e+00 : f32
    %29 = vector.broadcast %cst_11 : f32 to vector<1x128xf32>
    %30 = arith.maximumf %28, %29 : vector<1x128xf32>
    %cst_12 = arith.constant 9.99999974E-6 : f32
    %31 = vector.broadcast %cst_12 : f32 to vector<1x128xf32>
    %32 = arith.addf %30, %31 : vector<1x128xf32>
    %33 = math.rsqrt %32 : vector<1x128xf32>
    %34 = arith.mulf %2, %33 : vector<1x128xf32>
    %35 = arith.mulf %23, %34 : vector<1x128xf32>
    %36 = arith.subf %3, %35 : vector<1x128xf32>
    %37 = vector.broadcast %34 : vector<1x128xf32> to vector<8x128xf32>
    %38 = arith.mulf %16, %37 : vector<8x128xf32>
    %39 = vector.broadcast %36 : vector<1x128xf32> to vector<8x128xf32>
    %40 = arith.addf %38, %39 : vector<8x128xf32>
    %c0_13 = arith.constant 0 : index
    %c0_14 = arith.constant 0 : index
    %41 = vector.load %arg3[%c0_13, %c0_14] : memref<128x128xf32, #tpu.memory_space<vmem>>, vector<128x128xf32>
    %cst_15 = arith.constant dense<0.000000e+00> : vector<8x128xf32>
    %42 = tpu.matmul %40, %41, %cst_15 {dimension_numbers = #tpu.dot_dimension_numbers<[1], [0], [0], [1], [0, 0, 1, 1], [], []>} : vector<8x128xf32>, vector<128x128xf32>, vector<8x128xf32> -> vector<8x128xf32>
    %43 = vector.broadcast %4 : vector<1x128xf32> to vector<8x128xf32>
    %44 = arith.addf %42, %43 : vector<8x128xf32>
    %cst_16 = arith.constant 0.000000e+00 : f32
    %45 = vector.broadcast %cst_16 : f32 to vector<8x128xf32>
    %46 = arith.maximumf %44, %45 : vector<8x128xf32>
    %47 = arith.mulf %46, %46 : vector<8x128xf32>
    %48 = tpu.concatenate %46, %47 in 1 : vector<8x128xf32>, vector<8x128xf32> -> vector<8x256xf32>
    %cst_17 = arith.constant dense<0.000000e+00> : vector<256xf32>
    %49 = vector.multi_reduction <add>, %48, %cst_17 [0] : vector<8x256xf32> to vector<256xf32>
    %50 = vector.shape_cast %49 : vector<256xf32> to vector<1x256xf32>
    %51 = vector.extract_strided_slice %50 {offsets = [0, 0], sizes = [1, 128], strides = [1, 1]} : vector<1x256xf32> to vector<1x128xf32>
    %cst_18 = arith.constant 1.250000e-01 : f32
    %52 = vector.broadcast %cst_18 : f32 to vector<1x128xf32>
    %53 = arith.mulf %51, %52 : vector<1x128xf32>
    %54 = vector.extract_strided_slice %50 {offsets = [0, 128], sizes = [1, 128], strides = [1, 1]} : vector<1x256xf32> to vector<1x128xf32>
    %cst_19 = arith.constant 1.250000e-01 : f32
    %55 = vector.broadcast %cst_19 : f32 to vector<1x128xf32>
    %56 = arith.mulf %54, %55 : vector<1x128xf32>
    %57 = arith.mulf %53, %53 : vector<1x128xf32>
    %58 = arith.subf %56, %57 : vector<1x128xf32>
    %cst_20 = arith.constant 0.000000e+00 : f32
    %59 = vector.broadcast %cst_20 : f32 to vector<1x128xf32>
    %60 = arith.maximumf %58, %59 : vector<1x128xf32>
    %cst_21 = arith.constant 9.99999974E-6 : f32
    %61 = vector.broadcast %cst_21 : f32 to vector<1x128xf32>
    %62 = arith.addf %60, %61 : vector<1x128xf32>
    %63 = math.rsqrt %62 : vector<1x128xf32>
    %64 = arith.mulf %5, %63 : vector<1x128xf32>
    %65 = arith.mulf %53, %64 : vector<1x128xf32>
    %66 = arith.subf %6, %65 : vector<1x128xf32>
    %67 = vector.broadcast %64 : vector<1x128xf32> to vector<8x128xf32>
    %68 = arith.mulf %46, %67 : vector<8x128xf32>
    %69 = vector.broadcast %66 : vector<1x128xf32> to vector<8x128xf32>
    %70 = arith.addf %68, %69 : vector<8x128xf32>
    %c0_22 = arith.constant 0 : index
    %c0_23 = arith.constant 0 : index
    %71 = vector.load %arg4[%c0_22, %c0_23] : memref<128x128xf32, #tpu.memory_space<vmem>>, vector<128x128xf32>
    %cst_24 = arith.constant dense<0.000000e+00> : vector<8x128xf32>
    %72 = tpu.matmul %70, %71, %cst_24 {dimension_numbers = #tpu.dot_dimension_numbers<[1], [0], [0], [1], [0, 0, 1, 1], [], []>} : vector<8x128xf32>, vector<128x128xf32>, vector<8x128xf32> -> vector<8x128xf32>
    %73 = vector.broadcast %7 : vector<1x128xf32> to vector<8x128xf32>
    %74 = arith.addf %72, %73 : vector<8x128xf32>
    %cst_25 = arith.constant 0.000000e+00 : f32
    %75 = vector.broadcast %cst_25 : f32 to vector<8x128xf32>
    %76 = arith.subf %75, %74 : vector<8x128xf32>
    %77 = math.exp %76 : vector<8x128xf32>
    %cst_26 = arith.constant 1.000000e+00 : f32
    %78 = vector.broadcast %cst_26 : f32 to vector<8x128xf32>
    %79 = arith.addf %78, %77 : vector<8x128xf32>
    %cst_27 = arith.constant 1.000000e+00 : f32
    %80 = vector.broadcast %cst_27 : f32 to vector<8x128xf32>
    %81 = arith.divf %80, %79 : vector<8x128xf32>
    %c0_28 = arith.constant 0 : index
    %c0_29 = arith.constant 0 : index
    %82 = vector.load %arg6[%c0_28, %c0_29] : memref<8x128xf32, #tpu.memory_space<vmem>>, vector<8x128xf32>
    tpu.vector_store %arg6[%c0_28, %c0_29], %81 {strides = array<i32>} : memref<8x128xf32, #tpu.memory_space<vmem>>, vector<8x128xf32>,
    return
  }
}

</mosaic_0001>

<llo_original>
// kernel: gain_forward.1
$region0: #{gain_forward.1}
  #allocation0 [shape = 'u32[]', space=smem, size = 0x4, offset = 0x4, fixed_abs, tag = 'smem constant byte address 0x4 - core index']
  #allocation1 [shape = 'u32[144,128]{1,0:T(1,128)}', space=vmem, size = 0x12000, scoped, tag = 'internal scratch']
  %s0 = inlined_call_operand.vmem [shape: f32[8,128], index: 0, kind: input, shape index: {}]
  %s1 = inlined_call_operand.vmem [shape: f32[8,128], index: 1, kind: input, shape index: {}]
  %s2 = inlined_call_operand.vmem [shape: f32[256,128], index: 2, kind: input, shape index: {}]
  %s3 = inlined_call_operand.vmem [shape: f32[128,128], index: 3, kind: input, shape index: {}]
  %s4 = inlined_call_operand.vmem [shape: f32[128,128], index: 4, kind: input, shape index: {}]
  %s5 = inlined_call_operand.vmem [shape: f32[8,128], index: 5, kind: input, shape index: {}]
  %s6 = inlined_call_operand.hbm [shape: f32[8,128], index: 6, kind: output, shape index: {}]
  %s7 = sld [smem:[#allocation0]]
  $region34: #{gain_forward.1} parent=0
    _
  %s9 = ssub.s32 1, %s7
  %s10 = scalar_select 0, %s9, %s7
  $region1: #{gain_forward.1} parent=0
    #allocation2 [shape = 'u8[4096]{0}', space=vmem, size = 0x1000, scoped, tag = 'output window, operand 0, single buffered']
    #allocation3 [shape = 's32[1]{0}', space=sflag, size = 0x4, scoped, tag = 'scoped memory for gain_forward.1']
    %11 = vsyncpa [#allocation3], 0
    // Predicated region
    $region2: #{gain_forward.1} parent=1 // pred_check
      _
    $region3: #{gain_forward.1} parent=1 // pred_check_branch
      %13 = sbr.rel (0) target = $region5
    $region4: #{gain_forward.1} parent=1 // pred_region
      _
    $region5: #{gain_forward.1} parent=1 // pred_fallthru
      _
    // Predicated region
    $region6: #{gain_forward.1} parent=1 // pred_check
      _
    $region7: #{gain_forward.1} parent=1 // pred_check_branch
      %15 = sbr.rel (0) target = $region9
    $region8: #{gain_forward.1} parent=1 // pred_region
      _
    $region9: #{gain_forward.1} parent=1 // pred_fallthru
      _
    // Predicated region
    $region10: #{gain_forward.1} parent=1 // pred_check
      _
    $region11: #{gain_forward.1} parent=1 // pred_check_branch
      %17 = sbr.rel (0) target = $region13
    $region12: #{gain_forward.1} parent=1 // pred_region
      _
    $region13: #{gain_forward.1} parent=1 // pred_fallthru
      _
    // Predicated region
    $region14: #{gain_forward.1} parent=1 // pred_check
      _
    $region15: #{gain_forward.1} parent=1 // pred_check_branch
      %19 = sbr.rel (0) target = $region17
    $region16: #{gain_forward.1} parent=1 // pred_region
      _
    $region17: #{gain_forward.1} parent=1 // pred_fallthru
      _
    // Predicated region
    $region18: #{gain_forward.1} parent=1 // pred_check
      _
    $region19: #{gain_forward.1} parent=1 // pred_check_branch
      %21 = sbr.rel (0) target = $region21
    $region20: #{gain_forward.1} parent=1 // pred_region
      _
    $region21: #{gain_forward.1} parent=1 // pred_fallthru
      _
    // Predicated region
    $region22: #{gain_forward.1} parent=1 // pred_check
      _
    $region23: #{gain_forward.1} parent=1 // pred_check_branch
      %23 = sbr.rel (0) target = $region25
    $region24: #{gain_forward.1} parent=1 // pred_region
      _
    $region25: #{gain_forward.1} parent=1 // pred_fallthru
      _
    %v24 = vld [vmem:[%s5] sm:$0xff]
    %v25 = vld [vmem:[%s0] sm:$0xff]
    %v26 = vld [vmem:[%s1] sm:$0xff]
    %v27 = vld [vmem:[%s2] sm:$0xff]
    %v28 = vld [vmem:[%s2 + $0x8] sm:$0xff]
    %v29 = vld [vmem:[%s2 + $0x10] sm:$0xff]
    %v30 = vld [vmem:[%s2 + $0x18] sm:$0xff]
    %v31 = vld [vmem:[%s2 + $0x20] sm:$0xff]
    %v32 = vld [vmem:[%s2 + $0x28] sm:$0xff]
    %v33 = vld [vmem:[%s2 + $0x30] sm:$0xff]
    %v34 = vld [vmem:[%s2 + $0x38] sm:$0xff]
    %v35 = vld [vmem:[%s2 + $0x40] sm:$0xff]
    %v36 = vld [vmem:[%s2 + $0x48] sm:$0xff]
    %v37 = vld [vmem:[%s2 + $0x50] sm:$0xff]
    %v38 = vld [vmem:[%s2 + $0x58] sm:$0xff]
    %v39 = vld [vmem:[%s2 + $0x60] sm:$0xff]
    %v40 = vld [vmem:[%s2 + $0x68] sm:$0xff]
    %v41 = vld [vmem:[%s2 + $0x70] sm:$0xff]
    %v42 = vld [vmem:[%s2 + $0x78] sm:$0xff]
    %v43 = vld [vmem:[%s2 + $0x80] sm:$0xff]
    %v44 = vld [vmem:[%s2 + $0x88] sm:$0xff]
    %v45 = vld [vmem:[%s2 + $0x90] sm:$0xff]
    %v46 = vld [vmem:[%s2 + $0x98] sm:$0xff]
    %v47 = vld [vmem:[%s2 + $0xa0] sm:$0xff]
    %v48 = vld [vmem:[%s2 + $0xa8] sm:$0xff]
    %v49 = vld [vmem:[%s2 + $0xb0] sm:$0xff]
    %v50 = vld [vmem:[%s2 + $0xb8] sm:$0xff]
    %v51 = vld [vmem:[%s2 + $0xc0] sm:$0xff]
    %v52 = vld [vmem:[%s2 + $0xc8] sm:$0xff]
    %v53 = vld [vmem:[%s2 + $0xd0] sm:$0xff]
    %v54 = vld [vmem:[%s2 + $0xd8] sm:$0xff]
    %v55 = vld [vmem:[%s2 + $0xe0] sm:$0xff]
    %v56 = vld [vmem:[%s2 + $0xe8] sm:$0xff]
    %v57 = vld [vmem:[%s2 + $0xf0] sm:$0xff]
    %v58 = vld [vmem:[%s2 + $0xf8] sm:$0xff]
    %v59 = vlaneseq
    %v60 = vshrl.u32 %v59, 7
    %v61 = vsub.s32 0, %v60
    %v62 = vrot.slane %v24, %v61
    %63 = vmatprep.subr.mxu0 0.0
    %64 = vmatpush1.msra.mxu0 %v27
    %65 = vmatprep.subr.mxu0 0.0
    %66 = vmatpush1.msra.mxu0 %v28
    %67 = vmatprep.subr.mxu0 0.0
    %68 = vmatpush1.msra.mxu0 %v29
    %69 = vmatprep.subr.mxu0 0.0
    %70 = vmatpush1.msra.mxu0 %v30
    %71 = vmatprep.subr.mxu0 0.0
    %72 = vmatpush1.msra.mxu0 %v31
    %73 = vmatprep.subr.mxu0 0.0
    %74 = vmatpush1.msra.mxu0 %v32
    %75 = vmatprep.subr.mxu0 0.0
    %76 = vmatpush1.msra.mxu0 %v33
    %77 = vmatprep.subr.mxu0 0.0
    %78 = vmatpush1.msra.mxu0 %v34
    %79 = vmatprep.subr.mxu0 0.0
    %80 = vmatpush1.msra.mxu0 %v35
    %81 = vmatprep.subr.mxu0 0.0
    %82 = vmatpush1.msra.mxu0 %v36
    %83 = vmatprep.subr.mxu0 0.0
    %84 = vmatpush1.msra.mxu0 %v37
    %85 = vmatprep.subr.mxu0 0.0
    %86 = vmatpush1.msra.mxu0 %v38
    %87 = vmatprep.subr.mxu0 0.0
    %88 = vmatpush1.msra.mxu0 %v39
    %89 = vmatprep.subr.mxu0 0.0
    %90 = vmatpush1.msra.mxu0 %v40
    %91 = vmatprep.subr.mxu0 0.0
    %92 = vmatpush1.msra.mxu0 %v41
    %93 = vmatprep.subr.mxu0 0.0
    %94 = vmatpush1.msra.mxu0 %v42
    %95 = vmatprep.subr.mxu0 0.0
    %96 = vmatpush1.msra.mxu0 %v43
    %97 = vmatprep.subr.mxu0 0.0
    %98 = vmatpush1.msra.mxu0 %v44
    %99 = vmatprep.subr.mxu0 0.0
    %100 = vmatpush1.msra.mxu0 %v45
    %101 = vmatprep.subr.mxu0 0.0
    %102 = vmatpush1.msra.mxu0 %v46
    %103 = vmatprep.subr.mxu0 0.0
    %104 = vmatpush1.msra.mxu0 %v47
    %105 = vmatprep.subr.mxu0 0.0
    %106 = vmatpush1.msra.mxu0 %v48
    %107 = vmatprep.subr.mxu0 0.0
    %108 = vmatpush1.msra.mxu0 %v49
    %109 = vmatprep.subr.mxu0 0.0
    %110 = vmatpush1.msra.mxu0 %v50
    %111 = vmatprep.subr.mxu0 0.0
    %112 = vmatpush1.msra.mxu0 %v51
    %113 = vmatprep.subr.mxu0 0.0
    %114 = vmatpush1.msra.mxu0 %v52
    %115 = vmatprep.subr.mxu0 0.0
    %116 = vmatpush1.msra.mxu0 %v53
    %117 = vmatprep.subr.mxu0 0.0
    %118 = vmatpush1.msra.mxu0 %v54
    %119 = vmatprep.subr.mxu0 0.0
    %120 = vmatpush1.msra.mxu0 %v55
    %121 = vmatprep.subr.mxu0 0.0
    %122 = vmatpush1.msra.mxu0 %v56
    %123 = vmatprep.subr.mxu0 0.0
    %124 = vmatpush1.msra.mxu0 %v57
    %125 = vmatprep.subr.mxu0 0.0
    %126 = vmatpush1.msra.mxu0 %v58
    %127 = vmatprep.mubr.f32.mxu0 %v26
    %128 = vmatmul.mubr.f32.gmra.mrb[0].mxu0 %v25
    %v129 = vpop.f32.mrb[0].mxu0
    %v130 = vadd.f32 %v62, %v129
    %v131 = vpop.f32.mrb[0].mxu0
    %132 = vdwg.mxu0
    %v133 = vmax.f32 %v130, 0.0
    %v134 = vmul.f32 %v133, %v133
    %v135 = vrot.slane %v133, 4
    %v136 = vadd.f32 %v133, %v135
    %v137 = vrot.slane %v136, 2
    %v138 = vadd.f32 %v136, %v137
    %v139 = vrot.slane %v138, 1
    %v140 = vadd.f32 %v138, %v139
    %v141 = vrot.slane %v134, 4
    %v142 = vadd.f32 %v134, %v141
    %v143 = vrot.slane %v142, 2
    %v144 = vadd.f32 %v142, %v143
    %v145 = vrot.slane %v144, 1
    %v146 = vadd.f32 %v144, %v145
    %v147 = vmul.f32 %v140, 0.125
    %v148 = vmul.f32 %v146, 0.125
    %v149 = vmul.f32 %v147, %v147
    %v150 = vsub.f32 %v148, %v149
    %v151 = vmax.f32 %v150, 0.0
    %v152 = vadd.f32 %v151, 1e-05
    %v153 = vrsqrt.pop %v152
    %v154 = vmul.f32 %v24, %v153
    %v155 = vmul.f32 %v147, %v154
    %v157 = vrot.slane %v155, 7
    %v159 = vsub.f32 %v24, %v157
    %v160 = vlaneseq
    %v161 = vshrl.u32 %v160, 7
    %v162 = vsub.s32 1, %v161
    %v163 = vrot.slane %v154, %v162
    %v164 = vmul.f32 %v133, %v163
    %v165 = vlaneseq
    %v166 = vshrl.u32 %v165, 7
    %v167 = vsub.s32 2, %v166
    %v168 = vrot.slane %v159, %v167
    %v169 = vadd.f32 %v164, %v168
    %v170 = vld [vmem:[%s3] sm:$0xff]
    %v171 = vld [vmem:[%s3 + $0x8] sm:$0xff]
    %v172 = vld [vmem:[%s3 + $0x10] sm:$0xff]
    %v173 = vld [vmem:[%s3 + $0x18] sm:$0xff]
    %v174 = vld [vmem:[%s3 + $0x20] sm:$0xff]
    %v175 = vld [vmem:[%s3 + $0x28] sm:$0xff]
    %v176 = vld [vmem:[%s3 + $0x30] sm:$0xff]
    %v177 = vld [vmem:[%s3 + $0x38] sm:$0xff]
    %v178 = vld [vmem:[%s3 + $0x40] sm:$0xff]
    %v179 = vld [vmem:[%s3 + $0x48] sm:$0xff]
    %v180 = vld [vmem:[%s3 + $0x50] sm:$0xff]
    %v181 = vld [vmem:[%s3 + $0x58] sm:$0xff]
    %v182 = vld [vmem:[%s3 + $0x60] sm:$0xff]
    %v183 = vld [vmem:[%s3 + $0x68] sm:$0xff]
    %v184 = vld [vmem:[%s3 + $0x70] sm:$0xff]
    %v185 = vld [vmem:[%s3 + $0x78] sm:$0xff]
    %v186 = vlaneseq
    %v187 = vshrl.u32 %v186, 7
    %v188 = vsub.s32 3, %v187
    %v189 = vrot.slane %v24, %v188
    %190 = vmatprep.subr.mxu0 0.0
    %191 = vmatpush1.msra.mxu0 %v170
    %192 = vmatprep.subr.mxu0 0.0
    %193 = vmatpush1.msra.mxu0 %v171
    %194 = vmatprep.subr.mxu0 0.0
    %195 = vmatpush1.msra.mxu0 %v172
    %196 = vmatprep.subr.mxu0 0.0
    %197 = vmatpush1.msra.mxu0 %v173
    %198 = vmatprep.subr.mxu0 0.0
    %199 = vmatpush1.msra.mxu0 %v174
    %200 = vmatprep.subr.mxu0 0.0
    %201 = vmatpush1.msra.mxu0 %v175
    %202 = vmatprep.subr.mxu0 0.0
    %203 = vmatpush1.msra.mxu0 %v176
    %204 = vmatprep.subr.mxu0 0.0
    %205 = vmatpush1.msra.mxu0 %v177
    %206 = vmatprep.subr.mxu0 0.0
    %207 = vmatpush1.msra.mxu0 %v178
    %208 = vmatprep.subr.mxu0 0.0
    %209 = vmatpush1.msra.mxu0 %v179
    %210 = vmatprep.subr.mxu0 0.0
    %211 = vmatpush1.msra.mxu0 %v180
    %212 = vmatprep.subr.mxu0 0.0
    %213 = vmatpush1.msra.mxu0 %v181
    %214 = vmatprep.subr.mxu0 0.0
    %215 = vmatpush1.msra.mxu0 %v182
    %216 = vmatprep.subr.mxu0 0.0
    %217 = vmatpush1.msra.mxu0 %v183
    %218 = vmatprep.subr.mxu0 0.0
    %219 = vmatpush1.msra.mxu0 %v184
    %220 = vmatprep.subr.mxu0 0.0
    %221 = vmatpush1.msra.mxu0 %v185
    %222 = vmatprep.subr.mxu0 0.0
    %223 = vmatpush1.msra.mxu0 0.0
    %224 = vmatprep.subr.mxu0 0.0
    %225 = vmatpush1.msra.mxu0 0.0
    %226 = vmatprep.subr.mxu0 0.0
    %227 = vmatpush1.msra.mxu0 0.0
    %228 = vmatprep.subr.mxu0 0.0
    %229 = vmatpush1.msra.mxu0 0.0
    %230 = vmatprep.subr.mxu0 0.0
    %231 = vmatpush1.msra.mxu0 0.0
    %232 = vmatprep.subr.mxu0 0.0
    %233 = vmatpush1.msra.mxu0 0.0
    %234 = vmatprep.subr.mxu0 0.0
    %235 = vmatpush1.msra.mxu0 0.0
    %236 = vmatprep.subr.mxu0 0.0
    %237 = vmatpush1.msra.mxu0 0.0
    %238 = vmatprep.subr.mxu0 0.0
    %239 = vmatpush1.msra.mxu0 0.0
    %240 = vmatprep.subr.mxu0 0.0
    %241 = vmatpush1.msra.mxu0 0.0
    %242 = vmatprep.subr.mxu0 0.0
    %243 = vmatpush1.msra.mxu0 0.0
    %244 = vmatprep.subr.mxu0 0.0
    %245 = vmatpush1.msra.mxu0 0.0
    %246 = vmatprep.subr.mxu0 0.0
    %247 = vmatpush1.msra.mxu0 0.0
    %248 = vmatprep.subr.mxu0 0.0
    %249 = vmatpush1.msra.mxu0 0.0
    %250 = vmatprep.subr.mxu0 0.0
    %251 = vmatpush1.msra.mxu0 0.0
    %252 = vmatprep.subr.mxu0 0.0
    %253 = vmatpush1.msra.mxu0 0.0
    %254 = vmatprep.mubr.f32.mxu0 0.0
    %255 = vmatmul.mubr.f32.gmra.mrb[0].mxu0 %v169
    %v256 = vpop.f32.mrb[0].mxu0
    %v257 = vadd.f32 %v189, %v256
    %v258 = vpop.f32.mrb[0].mxu0
    %259 = vdwg.mxu0
    %v260 = vmax.f32 %v257, 0.0
    %v261 = vmul.f32 %v260, %v260
    %v262 = vrot.slane %v260, 4
    %v263 = vadd.f32 %v260, %v262
    %v264 = vrot.slane %v263, 2
    %v265 = vadd.f32 %v263, %v264
    %v266 = vrot.slane %v265, 1
    %v267 = vadd.f32 %v265, %v266
    %v268 = vrot.slane %v261, 4
    %v269 = vadd.f32 %v261, %v268
    %v270 = vrot.slane %v269, 2
    %v271 = vadd.f32 %v269, %v270
    %v272 = vrot.slane %v271, 1
    %v273 = vadd.f32 %v271, %v272
    %v274 = vmul.f32 %v267, 0.125
    %v275 = vmul.f32 %v273, 0.125
    %v276 = vmul.f32 %v274, %v274
    %v277 = vsub.f32 %v275, %v276
    %v278 = vmax.f32 %v277, 0.0
    %v279 = vadd.f32 %v278, 1e-05
    %v280 = vrsqrt.pop %v279
    %v281 = vmul.f32 %v24, %v280
    %v282 = vmul.f32 %v274, %v281
    %v284 = vrot.slane %v282, 7
    %v286 = vsub.f32 %v24, %v284
    %v287 = vlaneseq
    %v288 = vshrl.u32 %v287, 7
    %v289 = vsub.s32 4, %v288
    %v290 = vrot.slane %v281, %v289
    %v291 = vmul.f32 %v260, %v290
    %v292 = vlaneseq
    %v293 = vshrl.u32 %v292, 7
    %v294 = vsub.s32 5, %v293
    %v295 = vrot.slane %v286, %v294
    %v296 = vadd.f32 %v291, %v295
    %v297 = vld [vmem:[%s4] sm:$0xff]
    %v298 = vld [vmem:[%s4 + $0x8] sm:$0xff]
    %v299 = vld [vmem:[%s4 + $0x10] sm:$0xff]
    %v300 = vld [vmem:[%s4 + $0x18] sm:$0xff]
    %v301 = vld [vmem:[%s4 + $0x20] sm:$0xff]
    %v302 = vld [vmem:[%s4 + $0x28] sm:$0xff]
    %v303 = vld [vmem:[%s4 + $0x30] sm:$0xff]
    %v304 = vld [vmem:[%s4 + $0x38] sm:$0xff]
    %v305 = vld [vmem:[%s4 + $0x40] sm:$0xff]
    %v306 = vld [vmem:[%s4 + $0x48] sm:$0xff]
    %v307 = vld [vmem:[%s4 + $0x50] sm:$0xff]
    %v308 = vld [vmem:[%s4 + $0x58] sm:$0xff]
    %v309 = vld [vmem:[%s4 + $0x60] sm:$0xff]
    %v310 = vld [vmem:[%s4 + $0x68] sm:$0xff]
    %v311 = vld [vmem:[%s4 + $0x70] sm:$0xff]
    %v312 = vld [vmem:[%s4 + $0x78] sm:$0xff]
    %v313 = vlaneseq
    %v314 = vshrl.u32 %v313, 7
    %v315 = vsub.s32 6, %v314
    %v316 = vrot.slane %v24, %v315
    %317 = vmatprep.subr.mxu0 0.0
    %318 = vmatpush1.msra.mxu0 %v297
    %319 = vmatprep.subr.mxu0 0.0
    %320 = vmatpush1.msra.mxu0 %v298
    %321 = vmatprep.subr.mxu0 0.0
    %322 = vmatpush1.msra.mxu0 %v299
    %323 = vmatprep.subr.mxu0 0.0
    %324 = vmatpush1.msra.mxu0 %v300
    %325 = vmatprep.subr.mxu0 0.0
    %326 = vmatpush1.msra.mxu0 %v301
    %327 = vmatprep.subr.mxu0 0.0
    %328 = vmatpush1.msra.mxu0 %v302
    %329 = vmatprep.subr.mxu0 0.0
    %330 = vmatpush1.msra.mxu0 %v303
    %331 = vmatprep.subr.mxu0 0.0
    %332 = vmatpush1.msra.mxu0 %v304
    %333 = vmatprep.subr.mxu0 0.0
    %334 = vmatpush1.msra.mxu0 %v305
    %335 = vmatprep.subr.mxu0 0.0
    %336 = vmatpush1.msra.mxu0 %v306
    %337 = vmatprep.subr.mxu0 0.0
    %338 = vmatpush1.msra.mxu0 %v307
    %339 = vmatprep.subr.mxu0 0.0
    %340 = vmatpush1.msra.mxu0 %v308
    %341 = vmatprep.subr.mxu0 0.0
    %342 = vmatpush1.msra.mxu0 %v309
    %343 = vmatprep.subr.mxu0 0.0
    %344 = vmatpush1.msra.mxu0 %v310
    %345 = vmatprep.subr.mxu0 0.0
    %346 = vmatpush1.msra.mxu0 %v311
    %347 = vmatprep.subr.mxu0 0.0
    %348 = vmatpush1.msra.mxu0 %v312
    %349 = vmatprep.subr.mxu0 0.0
    %350 = vmatpush1.msra.mxu0 0.0
    %351 = vmatprep.subr.mxu0 0.0
    %352 = vmatpush1.msra.mxu0 0.0
    %353 = vmatprep.subr.mxu0 0.0
    %354 = vmatpush1.msra.mxu0 0.0
    %355 = vmatprep.subr.mxu0 0.0
    %356 = vmatpush1.msra.mxu0 0.0
    %357 = vmatprep.subr.mxu0 0.0
    %358 = vmatpush1.msra.mxu0 0.0
    %359 = vmatprep.subr.mxu0 0.0
    %360 = vmatpush1.msra.mxu0 0.0
    %361 = vmatprep.subr.mxu0 0.0
    %362 = vmatpush1.msra.mxu0 0.0
    %363 = vmatprep.subr.mxu0 0.0
    %364 = vmatpush1.msra.mxu0 0.0
    %365 = vmatprep.subr.mxu0 0.0
    %366 = vmatpush1.msra.mxu0 0.0
    %367 = vmatprep.subr.mxu0 0.0
    %368 = vmatpush1.msra.mxu0 0.0
    %369 = vmatprep.subr.mxu0 0.0
    %370 = vmatpush1.msra.mxu0 0.0
    %371 = vmatprep.subr.mxu0 0.0
    %372 = vmatpush1.msra.mxu0 0.0
    %373 = vmatprep.subr.mxu0 0.0
    %374 = vmatpush1.msra.mxu0 0.0
    %375 = vmatprep.subr.mxu0 0.0
    %376 = vmatpush1.msra.mxu0 0.0
    %377 = vmatprep.subr.mxu0 0.0
    %378 = vmatpush1.msra.mxu0 0.0
    %379 = vmatprep.subr.mxu0 0.0
    %380 = vmatpush1.msra.mxu0 0.0
    %381 = vmatprep.mubr.f32.mxu0 0.0
    %382 = vmatmul.mubr.f32.gmra.mrb[0].mxu0 %v296
    %v383 = vpop.f32.mrb[0].mxu0
    %v384 = vadd.f32 %v316, %v383
    %v385 = vpop.f32.mrb[0].mxu0
    %386 = vdwg.mxu0
    %v387 = vsub.f32 0.0, %v384
    %v388 = vmul.f32 %v387, 1.442695
    %v389 = vpow.pop %v388
    %v390 = vadd.f32 %v389, 1.0
    %v391 = vrcp.pop %v390
    %v392 = vmul.f32 1.0, %v391
    %393 = vst [vmem:[#allocation2] sm:$0xff] %v392
    // Predicated region
    $region26: #{gain_forward.1} parent=1 // pred_check
      _
    $region27: #{gain_forward.1} parent=1 // pred_check_branch
      %395 = sbr.rel (0) target = $region29
    $region28: #{gain_forward.1} parent=1 // pred_region
      %s397 = ssub.s32 128, 128
      %398 = vsyncadd [#allocation3], %s397
      %s400 = sshll.u32 [#allocation2], 4
      %s401 = int_to_ptr.vmem [resolvable:$true] %s400
      %403 = dma.vmem_to_hbm [thread:$0]  %s401, 128, %s6, [#allocation3]
    $region29: #{gain_forward.1} parent=1 // pred_fallthru
      _
    // Predicated region
    $region30: #{gain_forward.1} parent=1 // pred_check
      _
    $region31: #{gain_forward.1} parent=1 // pred_check_branch
      %405 = sbr.rel (0) target = $region33
    $region32: #{gain_forward.1} parent=1 // pred_region
      %406 = dma.done [#allocation3], 128
    $region33: #{gain_forward.1} parent=1 // pred_fallthru
      _
    %407 = vsyncpa [#allocation3], 1

</llo_original>
